<compile_context>
chip_gen: v6e
topology: v6e:2x2x1
jax: 0.10.0
libtpu: 0.0.40
codegen_flags: <defaults>
</compile_context>

<pallas_src>
import functools

import jax
import jax.numpy as jnp
from jax import lax
from jax.experimental import pallas as pl
from jax.experimental.pallas import tpu as pltpu


def _tpn_loss_kernel(src_feat_ref, trg_feat_ref, src_lab_ref, trg_lab_ref,
                     out_ref, *, num_classes):
    C = num_classes
    sf = src_feat_ref[...]            # (ns, D) f32
    tf = trg_feat_ref[...]            # (nt, D) f32
    sl = src_lab_ref[...]             # (ns, 1) i32
    tl = trg_lab_ref[...]             # (nt, 1) i32
    ns = sf.shape[0]
    nt = tf.shape[0]
    n = ns + nt

    # --- one-hot label matrices (reused for prototypes + CE true-logit) ----
    oh_s = (lax.broadcasted_iota(jnp.int32, (ns, C), 1) == sl).astype(jnp.float32)
    oh_t = (lax.broadcasted_iota(jnp.int32, (nt, C), 1) == tl).astype(jnp.float32)

    # --- class prototype SUMS from the trg rows (one MXU op) ---------------
    # contract over nt: (nt, C)^T @ (nt, D) -> (C, D)
    u_sum = lax.dot_general(oh_t, tf, (((0,), (0,)), ((), ())),
                            preferred_element_type=jnp.float32)       # (C, D)

    # --- class counts via sublane (XLU) reduction, no extra matmul ---------
    counts = jnp.sum(oh_t, axis=0, keepdims=True)                     # (1, C)
    inv_counts = pl.reciprocal(counts, approx=False)                  # (1, C)

    # --- logits against unscaled prototypes, column-scaled by 1/count ------
    # P[:, c] = feats @ u_sum[c] / counts[c]  ==  feats @ u_t.T
    P_s = lax.dot_general(sf, u_sum, (((1,), (1,)), ((), ())),
                          preferred_element_type=jnp.float32) * inv_counts  # (ns, C)
    P_t = lax.dot_general(tf, u_sum, (((1,), (1,)), ((), ())),
                          preferred_element_type=jnp.float32) * inv_counts  # (nt, C)

    # --- cross entropy, mean reduction over all ns + nt rows ----------------
    def _ce_rowsum(P, oh):
        m = jnp.max(P, axis=-1, keepdims=True)                         # (r, 1)
        lse = m + jnp.log(jnp.sum(jnp.exp(P - m), axis=-1, keepdims=True))
        true_logit = jnp.sum(P * oh, axis=-1, keepdims=True)           # (r, 1)
        return jnp.sum(lse - true_logit)                               # scalar

    total = _ce_rowsum(P_s, oh_s) + _ce_rowsum(P_t, oh_t)
    out_ref[0, 0] = total * jnp.float32(1.0 / n)


def tpn_task_loss(src_feat, trg_feat, src_label, trg_label, *, num_classes):
    """Pallas implementation of TpnTaskLoss_Non_Param_Simple.forward."""
    src_feat = src_feat.astype(jnp.float32)
    trg_feat = trg_feat.astype(jnp.float32)
    # Column-shaped labels; reshape of a contiguous vector is layout-free.
    src_lab = src_label.astype(jnp.int32).reshape(-1, 1)
    trg_lab = trg_label.astype(jnp.int32).reshape(-1, 1)

    kernel = functools.partial(_tpn_loss_kernel, num_classes=num_classes)
    vmem = pltpu.MemorySpace.VMEM
    smem = pltpu.MemorySpace.SMEM
    out = pl.pallas_call(
        kernel,
        out_shape=jax.ShapeDtypeStruct((1, 1), jnp.float32),
        in_specs=[
            pl.BlockSpec(memory_space=vmem),   # src_feat
            pl.BlockSpec(memory_space=vmem),   # trg_feat
            pl.BlockSpec(memory_space=vmem),   # src_label column
            pl.BlockSpec(memory_space=vmem),   # trg_label column
        ],
        out_specs=pl.BlockSpec(memory_space=smem),
    )(src_feat, trg_feat, src_lab, trg_lab)
    return out[0, 0]


def _reference(src_feat, trg_feat, src_label, trg_label, num_classes):
    """Pure-JAX reference mirroring the PyTorch forward."""
    C = num_classes
    oh_t = jax.nn.one_hot(trg_label, C, dtype=jnp.float32)            # (nt, C)
    u_sum = oh_t.T @ trg_feat                                          # (C, D)
    counts = oh_t.sum(axis=0)[:, None]                                 # (C, 1)
    u_t = u_sum / counts
    feats = jnp.concatenate([src_feat, trg_feat], axis=0)
    labels = jnp.concatenate([src_label, trg_label], axis=0)
    P = feats @ u_t.T
    logp = jax.nn.log_softmax(P, axis=-1)
    nll = -jnp.take_along_axis(logp, labels[:, None], axis=-1)[:, 0]
    return jnp.mean(nll)


if __name__ == "__main__":
    key = jax.random.PRNGKey(0)
    k1, k2, k3, k4 = jax.random.split(key, 4)

    ns, nt, dim, num_classes = 8, 16, 32, 4

    src_feat = jax.random.normal(k1, (ns, dim), dtype=jnp.float32)
    trg_feat = jax.random.normal(k2, (nt, dim), dtype=jnp.float32)

    # Guarantee every class 0..C-1 appears in both src and trg labels
    # (required for torch.unique == arange(C) and non-empty class means).
    src_label = jnp.concatenate([
        jnp.arange(num_classes, dtype=jnp.int32),
        jax.random.randint(k3, (ns - num_classes,), 0, num_classes, jnp.int32),
    ])
    trg_label = jnp.concatenate([
        jnp.arange(num_classes, dtype=jnp.int32),
        jax.random.randint(k4, (nt - num_classes,), 0, num_classes, jnp.int32),
    ])

    loss = tpn_task_loss(src_feat, trg_feat, src_label, trg_label,
                         num_classes=num_classes)
    loss = jax.block_until_ready(loss)

    ref = _reference(src_feat, trg_feat, src_label, trg_label, num_classes)
    assert jnp.allclose(loss, ref, rtol=1e-5, atol=1e-5), (loss, ref)

    print("KERNEL_OK")
</pallas_src>

<mosaic_0001>
module attributes {stable_mosaic.version = 11 : i64} {
  func.func @_tpn_loss_kernel(%arg0: memref<8x32xf32, #tpu.memory_space<vmem>>, %arg1: memref<16x32xf32, #tpu.memory_space<vmem>>, %arg2: memref<8x1xi32, #tpu.memory_space<vmem>>, %arg3: memref<16x1xi32, #tpu.memory_space<vmem>>, %arg4: memref<1x1xf32, #tpu.memory_space<smem>>) attributes {dimension_semantics = [], scalar_prefetch = 0 : i64, scratch_operands = 0 : i64, tpu.core_type = #tpu.core_type<tc>} {
    %c0 = arith.constant 0 : index
    %c0_0 = arith.constant 0 : index
    %0 = vector.load %arg0[%c0, %c0_0] : memref<8x32xf32, #tpu.memory_space<vmem>>, vector<8x32xf32>
    %c0_1 = arith.constant 0 : index
    %c0_2 = arith.constant 0 : index
    %1 = vector.load %arg1[%c0_1, %c0_2] : memref<16x32xf32, #tpu.memory_space<vmem>>, vector<16x32xf32>
    %c0_3 = arith.constant 0 : index
    %c0_4 = arith.constant 0 : index
    %2 = vector.load %arg2[%c0_3, %c0_4] : memref<8x1xi32, #tpu.memory_space<vmem>>, vector<8x1xi32>
    %c0_5 = arith.constant 0 : index
    %c0_6 = arith.constant 0 : index
    %3 = vector.load %arg3[%c0_5, %c0_6] : memref<16x1xi32, #tpu.memory_space<vmem>>, vector<16x1xi32>
    %4 = tpu.iota {dimensions = array<i32: 1>} : vector<8x4xi32>
    %5 = vector.broadcast %2 : vector<8x1xi32> to vector<8x4xi32>
    %6 = arith.cmpi eq, %4, %5 : vector<8x4xi32>
    %7 = arith.extui %6 : vector<8x4xi1> to vector<8x4xi32>
    %8 = arith.sitofp %7 : vector<8x4xi32> to vector<8x4xf32>
    %9 = tpu.iota {dimensions = array<i32: 1>} : vector<16x4xi32>
    %10 = vector.broadcast %3 : vector<16x1xi32> to vector<16x4xi32>
    %11 = arith.cmpi eq, %9, %10 : vector<16x4xi32>
    %12 = arith.extui %11 : vector<16x4xi1> to vector<16x4xi32>
    %13 = arith.sitofp %12 : vector<16x4xi32> to vector<16x4xf32>
    %cst = arith.constant dense<0.000000e+00> : vector<4x32xf32>
    %14 = tpu.matmul %13, %1, %cst {dimension_numbers = #tpu.dot_dimension_numbers<[0], [0], [1], [1], [0, 1, 1, 1], [], []>} : vector<16x4xf32>, vector<16x32xf32>, vector<4x32xf32> -> vector<4x32xf32>
    %cst_7 = arith.constant dense<0.000000e+00> : vector<4xf32>
    %15 = vector.multi_reduction <add>, %13, %cst_7 [0] : vector<16x4xf32> to vector<4xf32>
    %16 = vector.shape_cast %15 : vector<4xf32> to vector<1x4xf32>
    %17 = tpu.reciprocal %16 : vector<1x4xf32> -> vector<1x4xf32>
    %cst_8 = arith.constant dense<0.000000e+00> : vector<8x4xf32>
    %18 = tpu.matmul %0, %14, %cst_8 {dimension_numbers = #tpu.dot_dimension_numbers<[1], [1], [0], [0], [0, 0, 1, 0], [], []>} : vector<8x32xf32>, vector<4x32xf32>, vector<8x4xf32> -> vector<8x4xf32>
    %19 = vector.broadcast %17 : vector<1x4xf32> to vector<8x4xf32>
    %20 = arith.mulf %18, %19 : vector<8x4xf32>
    %cst_9 = arith.constant dense<0.000000e+00> : vector<16x4xf32>
    %21 = tpu.matmul %1, %14, %cst_9 {dimension_numbers = #tpu.dot_dimension_numbers<[1], [1], [0], [0], [0, 0, 1, 0], [], []>} : vector<16x32xf32>, vector<4x32xf32>, vector<16x4xf32> -> vector<16x4xf32>
    %22 = vector.broadcast %17 : vector<1x4xf32> to vector<16x4xf32>
    %23 = arith.mulf %21, %22 : vector<16x4xf32>
    %cst_10 = arith.constant dense<0xFF800000> : vector<8xf32>
    %24 = vector.multi_reduction <maximumf>, %20, %cst_10 [1] : vector<8x4xf32> to vector<8xf32>
    %25 = vector.shape_cast %24 : vector<8xf32> to vector<8x1xf32>
    %26 = vector.broadcast %25 : vector<8x1xf32> to vector<8x4xf32>
    %27 = arith.subf %20, %26 : vector<8x4xf32>
    %28 = math.exp %27 : vector<8x4xf32>
    %cst_11 = arith.constant dense<0.000000e+00> : vector<8xf32>
    %29 = vector.multi_reduction <add>, %28, %cst_11 [1] : vector<8x4xf32> to vector<8xf32>
    %30 = vector.shape_cast %29 : vector<8xf32> to vector<8x1xf32>
    %31 = math.log %30 : vector<8x1xf32>
    %32 = arith.addf %25, %31 : vector<8x1xf32>
    %33 = arith.mulf %20, %8 : vector<8x4xf32>
    %cst_12 = arith.constant dense<0.000000e+00> : vector<8xf32>
    %34 = vector.multi_reduction <add>, %33, %cst_12 [1] : vector<8x4xf32> to vector<8xf32>
    %35 = vector.shape_cast %34 : vector<8xf32> to vector<8x1xf32>
    %36 = arith.subf %32, %35 : vector<8x1xf32>
    %37 = vector.shape_cast %36 : vector<8x1xf32> to vector<1x8x1xf32>
    %cst_13 = arith.constant dense<0.000000e+00> : vector<1xf32>
    %38 = vector.multi_reduction <add>, %37, %cst_13 [1, 2] : vector<1x8x1xf32> to vector<1xf32>
    %39 = vector.shape_cast %38 : vector<1xf32> to vector<1x1x1xf32>
    %40 = vector.extract %39[0, 0, 0] : f32 from vector<1x1x1xf32>
    %cst_14 = arith.constant dense<0xFF800000> : vector<16xf32>
    %41 = vector.multi_reduction <maximumf>, %23, %cst_14 [1] : vector<16x4xf32> to vector<16xf32>
    %42 = vector.shape_cast %41 : vector<16xf32> to vector<16x1xf32>
    %43 = vector.broadcast %42 : vector<16x1xf32> to vector<16x4xf32>
    %44 = arith.subf %23, %43 : vector<16x4xf32>
    %45 = math.exp %44 : vector<16x4xf32>
    %cst_15 = arith.constant dense<0.000000e+00> : vector<16xf32>
    %46 = vector.multi_reduction <add>, %45, %cst_15 [1] : vector<16x4xf32> to vector<16xf32>
    %47 = vector.shape_cast %46 : vector<16xf32> to vector<16x1xf32>
    %48 = math.log %47 : vector<16x1xf32>
    %49 = arith.addf %42, %48 : vector<16x1xf32>
    %50 = arith.mulf %23, %13 : vector<16x4xf32>
    %cst_16 = arith.constant dense<0.000000e+00> : vector<16xf32>
    %51 = vector.multi_reduction <add>, %50, %cst_16 [1] : vector<16x4xf32> to vector<16xf32>
    %52 = vector.shape_cast %51 : vector<16xf32> to vector<16x1xf32>
    %53 = arith.subf %49, %52 : vector<16x1xf32>
    %54 = vector.shape_cast %53 : vector<16x1xf32> to vector<1x16x1xf32>
    %cst_17 = arith.constant dense<0.000000e+00> : vector<1xf32>
    %55 = vector.multi_reduction <add>, %54, %cst_17 [1, 2] : vector<1x16x1xf32> to vector<1xf32>
    %56 = vector.shape_cast %55 : vector<1xf32> to vector<1x1x1xf32>
    %57 = vector.extract %56[0, 0, 0] : f32 from vector<1x1x1xf32>
    %58 = arith.addf %40, %57 : f32
    %cst_18 = arith.constant 0.0416666679 : f32
    %59 = arith.mulf %58, %cst_18 : f32
    %c0_19 = arith.constant 0 : index
    %c0_20 = arith.constant 0 : index
    %60 = memref.load %arg4[%c0_19, %c0_20] : memref<1x1xf32, #tpu.memory_space<smem>>
    memref.store %59, %arg4[%c0_19, %c0_20] : memref<1x1xf32, #tpu.memory_space<smem>>
    return
  }
}

</mosaic_0001>

<llo_original>
// kernel: tpu_custom_call.1
$region0: #{tpu_custom_call.1}
  #allocation0 [shape = 'u32[]', space=smem, size = 0x4, offset = 0x4, fixed_abs, tag = 'smem constant byte address 0x4 - core index']
  #allocation1 [shape = 'u32[144,128]{1,0:T(1,128)}', space=vmem, size = 0x12000, scoped, tag = 'internal scratch']
  %s0 = inlined_call_operand.vmem [shape: f32[8,32], index: 0, kind: input, shape index: {}]
  %s1 = inlined_call_operand.vmem [shape: f32[16,32], index: 1, kind: input, shape index: {}]
  %s2 = inlined_call_operand.vmem [shape: s32[8,1], index: 2, kind: input, shape index: {}]
  %s3 = inlined_call_operand.vmem [shape: s32[16,1], index: 3, kind: input, shape index: {}]
  %s4 = inlined_call_operand.hbm [shape: f32[1,1], index: 4, kind: output, shape index: {}]
  %s5 = sld [smem:[#allocation0]]
  $region26: #{tpu_custom_call.1} parent=0
    _
  %s7 = ssub.s32 1, %s5
  %s8 = scalar_select 0, %s7, %s5
  $region1: #{tpu_custom_call.1} parent=0
    #allocation2 [shape = 'u8[512]{0}', space=smem, size = 0x200, scoped, tag = 'output window, operand 0, single buffered']
    #allocation3 [shape = 's32[1]{0}', space=sflag, size = 0x4, scoped, tag = 'scoped memory for tpu_custom_call.1']
    %9 = vsyncpa [#allocation3], 0
    // Predicated region
    $region2: #{tpu_custom_call.1} parent=1 // pred_check
      _
    $region3: #{tpu_custom_call.1} parent=1 // pred_check_branch
      %11 = sbr.rel (0) target = $region5
    $region4: #{tpu_custom_call.1} parent=1 // pred_region
      _
    $region5: #{tpu_custom_call.1} parent=1 // pred_fallthru
      _
    // Predicated region
    $region6: #{tpu_custom_call.1} parent=1 // pred_check
      _
    $region7: #{tpu_custom_call.1} parent=1 // pred_check_branch
      %13 = sbr.rel (0) target = $region9
    $region8: #{tpu_custom_call.1} parent=1 // pred_region
      _
    $region9: #{tpu_custom_call.1} parent=1 // pred_fallthru
      _
    // Predicated region
    $region10: #{tpu_custom_call.1} parent=1 // pred_check
      _
    $region11: #{tpu_custom_call.1} parent=1 // pred_check_branch
      %15 = sbr.rel (0) target = $region13
    $region12: #{tpu_custom_call.1} parent=1 // pred_region
      _
    $region13: #{tpu_custom_call.1} parent=1 // pred_fallthru
      _
    // Predicated region
    $region14: #{tpu_custom_call.1} parent=1 // pred_check
      _
    $region15: #{tpu_custom_call.1} parent=1 // pred_check_branch
      %17 = sbr.rel (0) target = $region17
    $region16: #{tpu_custom_call.1} parent=1 // pred_region
      _
    $region17: #{tpu_custom_call.1} parent=1 // pred_fallthru
      _
    %v18 = vld [vmem:[%s0] sm:$0xff]
    %v19 = vld [vmem:[%s1] sm:$0xff]
    %v20 = vld [vmem:[%s1 + $0x8] sm:$0xff]
    %v21 = vld [vmem:[%s2] sm:$0xff]
    %v22 = vld [vmem:[%s3] sm:$0xff]
    %v23 = vld [vmem:[%s3 + $0x8] sm:$0xff]
    %v24 = vlaneseq
    %v25 = vand.u32 %v24, 127
    %26 = vset.pattern.permute.xlu0 0
    %27 = vperm.xlu0 %26, %v21
    %v28 = vpop.permute.xlu0 %27
    %vm29 = vcmp.eq.s32.totalorder %v25, %v28
    %v30 = vsel %vm29, 1, 0
    %v31 = vcvt.s32.f32 %v30
    %32 = vset.pattern.permute.xlu0 0
    %33 = vperm.xlu0 %32, %v22
    %v34 = vpop.permute.xlu0 %33
    %35 = vset.pattern.permute.xlu0 0
    %36 = vperm.xlu0 %35, %v23
    %v37 = vpop.permute.xlu0 %36
    %vm38 = vcmp.eq.s32.totalorder %v25, %v34
    %vm39 = vcmp.eq.s32.totalorder %v25, %v37
    %v40 = vsel %vm38, 1, 0
    %v41 = vsel %vm39, 1, 0
    %v42 = vcvt.s32.f32 %v40
    %v43 = vcvt.s32.f32 %v41
    %44 = vxpose.xlu0.b32.start [1/16] %v42, 128
    %45 = vxpose.xlu0.b32.cont [2/16] %v43, 128
    %46 = vxpose.xlu0.b32.cont [3/16] 0.0, 128
    %47 = vxpose.xlu0.b32.cont [4/16] 0.0, 128
    %48 = vxpose.xlu0.b32.cont [5/16] 0.0, 128
    %49 = vxpose.xlu0.b32.cont [6/16] 0.0, 128
    %50 = vxpose.xlu0.b32.cont [7/16] 0.0, 128
    %51 = vxpose.xlu0.b32.cont [8/16] 0.0, 128
    %52 = vxpose.xlu0.b32.cont [9/16] 0.0, 128
    %53 = vxpose.xlu0.b32.cont [10/16] 0.0, 128
    %54 = vxpose.xlu0.b32.cont [11/16] 0.0, 128
    %55 = vxpose.xlu0.b32.cont [12/16] 0.0, 128
    %56 = vxpose.xlu0.b32.cont [13/16] 0.0, 128
    %57 = vxpose.xlu0.b32.cont [14/16] 0.0, 128
    %58 = vxpose.xlu0.b32.cont [15/16] 0.0, 128
    %59 = vxpose.xlu0.b32.end [16/16] 0.0, 128
    %v60 = vpop.trf.xlu0
    %v61 = vpop.trf.xlu0
    %v62 = vpop.trf.xlu0
    %v63 = vpop.trf.xlu0
    %v64 = vpop.trf.xlu0
    %v65 = vpop.trf.xlu0
    %v66 = vpop.trf.xlu0
    %v67 = vpop.trf.xlu0
    %v68 = vpop.trf.xlu0
    %v69 = vpop.trf.xlu0
    %v70 = vpop.trf.xlu0
    %v71 = vpop.trf.xlu0
    %v72 = vpop.trf.xlu0
    %v73 = vpop.trf.xlu0
    %v74 = vpop.trf.xlu0
    %v75 = vpop.trf.xlu0
    %vm76 = vcmask 130048
    %v78 = vsel %vm76, %v60, 0
    %80 = vmatprep.subr.mxu0 0.0
    %81 = vmatpush1.msra.mxu0 0.0
    %82 = vmatprep.subr.mxu0 0.0
    %83 = vmatpush1.msra.mxu0 0.0
    %84 = vmatprep.subr.mxu0 0.0
    %85 = vmatpush1.msra.mxu0 0.0
    %86 = vmatprep.subr.mxu0 0.0
    %87 = vmatpush1.msra.mxu0 0.0
    %88 = vmatprep.subr.mxu0 0.0
    %89 = vmatpush1.msra.mxu0 0.0
    %90 = vmatprep.subr.mxu0 0.0
    %91 = vmatpush1.msra.mxu0 0.0
    %92 = vmatprep.subr.mxu0 0.0
    %93 = vmatpush1.msra.mxu0 0.0
    %94 = vmatprep.subr.mxu0 0.0
    %95 = vmatpush1.msra.mxu0 0.0
    %96 = vmatprep.subr.mxu0 0.0
    %97 = vmatpush1.msra.mxu0 0.0
    %98 = vmatprep.subr.mxu0 0.0
    %99 = vmatpush1.msra.mxu0 0.0
    %100 = vmatprep.subr.mxu0 0.0
    %101 = vmatpush1.msra.mxu0 0.0
    %102 = vmatprep.subr.mxu0 0.0
    %103 = vmatpush1.msra.mxu0 0.0
    %104 = vmatprep.subr.mxu0 0.0
    %105 = vmatpush1.msra.mxu0 0.0
    %106 = vmatprep.subr.mxu0 0.0
    %107 = vmatpush1.msra.mxu0 0.0
    %108 = vmatprep.subr.mxu0 0.0
    %109 = vmatpush1.msra.mxu0 %v20
    %110 = vmatprep.subr.mxu0 0.0
    %111 = vmatpush1.msra.mxu0 %v19
    %112 = vmatprep.subr.mxu0 0.0
    %113 = vmatpush2.msra.mxu0 0.0
    %114 = vmatprep.subr.mxu0 0.0
    %115 = vmatpush2.msra.mxu0 0.0
    %116 = vmatprep.subr.mxu0 0.0
    %117 = vmatpush2.msra.mxu0 0.0
    %118 = vmatprep.subr.mxu0 0.0
    %119 = vmatpush2.msra.mxu0 0.0
    %120 = vmatprep.subr.mxu0 0.0
    %121 = vmatpush2.msra.mxu0 0.0
    %122 = vmatprep.subr.mxu0 0.0
    %123 = vmatpush2.msra.mxu0 0.0
    %124 = vmatprep.subr.mxu0 0.0
    %125 = vmatpush2.msra.mxu0 0.0
    %126 = vmatprep.subr.mxu0 0.0
    %127 = vmatpush2.msra.mxu0 0.0
    %128 = vmatprep.subr.mxu0 0.0
    %129 = vmatpush2.msra.mxu0 0.0
    %130 = vmatprep.subr.mxu0 0.0
    %131 = vmatpush2.msra.mxu0 0.0
    %132 = vmatprep.subr.mxu0 0.0
    %133 = vmatpush2.msra.mxu0 0.0
    %134 = vmatprep.subr.mxu0 0.0
    %135 = vmatpush2.msra.mxu0 0.0
    %136 = vmatprep.subr.mxu0 0.0
    %137 = vmatpush2.msra.mxu0 0.0
    %138 = vmatprep.subr.mxu0 0.0
    %139 = vmatpush2.msra.mxu0 0.0
    %140 = vmatprep.subr.mxu0 0.0
    %141 = vmatpush2.msra.mxu0 0.0
    %142 = vmatprep.subr.mxu0 0.0
    %143 = vmatpush2.msra.mxu0 0.0
    %144 = vmatprep.mubr.f32.mxu0 0.0
    %145 = vmatmul.mubr.f32.gmra.mxu0 %v78
    %v146 = vpop.f32.mrf.mxu0
    %v147 = vadd.f32 0.0, %v146
    %v148 = vpop.f32.mrf.mxu0
    %149 = vdwg.mxu0
    %vm150 = vcmask 31744
    %v151 = vsel %vm150, %v42, 0.0
    %v152 = vsel %vm150, %v43, 0.0
    %v153 = vadd.f32 %v151, %v152
    %v154 = vrot.slane %v153, 4
    %v155 = vadd.f32 %v153, %v154
    %v156 = vrot.slane %v155, 2
    %v157 = vadd.f32 %v155, %v156
    %v158 = vrot.slane %v157, 1
    %v159 = vadd.f32 %v157, %v158
    %v160 = vrcp.pop %v159
    %vm161 = vcmask 261120
    %v163 = vsel %vm161, %v18, 0
    %v166 = vsel %vm161, %v147, 0
    %168 = vmatprep.subr.mxu0 0.0
    %169 = vmatpush1.xpose.msra.mxu0 0.0
    %170 = vmatprep.subr.mxu0 0.0
    %171 = vmatpush1.xpose.msra.mxu0 0.0
    %172 = vmatprep.subr.mxu0 0.0
    %173 = vmatpush1.xpose.msra.mxu0 0.0
    %174 = vmatprep.subr.mxu0 0.0
    %175 = vmatpush1.xpose.msra.mxu0 0.0
    %176 = vmatprep.subr.mxu0 0.0
    %177 = vmatpush1.xpose.msra.mxu0 0.0
    %178 = vmatprep.subr.mxu0 0.0
    %179 = vmatpush1.xpose.msra.mxu0 0.0
    %180 = vmatprep.subr.mxu0 0.0
    %181 = vmatpush1.xpose.msra.mxu0 0.0
    %182 = vmatprep.subr.mxu0 0.0
    %183 = vmatpush1.xpose.msra.mxu0 0.0
    %184 = vmatprep.subr.mxu0 0.0
    %185 = vmatpush1.xpose.msra.mxu0 0.0
    %186 = vmatprep.subr.mxu0 0.0
    %187 = vmatpush1.xpose.msra.mxu0 0.0
    %188 = vmatprep.subr.mxu0 0.0
    %189 = vmatpush1.xpose.msra.mxu0 0.0
    %190 = vmatprep.subr.mxu0 0.0
    %191 = vmatpush1.xpose.msra.mxu0 0.0
    %192 = vmatprep.subr.mxu0 0.0
    %193 = vmatpush1.xpose.msra.mxu0 0.0
    %194 = vmatprep.subr.mxu0 0.0
    %195 = vmatpush1.xpose.msra.mxu0 0.0
    %196 = vmatprep.subr.mxu0 0.0
    %197 = vmatpush1.xpose.msra.mxu0 0.0
    %198 = vmatprep.subr.mxu0 0.0
    %199 = vmatpush1.xpose.msra.mxu0 %v166
    %200 = vmatprep.subr.mxu0 0.0
    %201 = vmatpush2.xpose.msra.mxu0 0.0
    %202 = vmatprep.subr.mxu0 0.0
    %203 = vmatpush2.xpose.msra.mxu0 0.0
    %204 = vmatprep.subr.mxu0 0.0
    %205 = vmatpush2.xpose.msra.mxu0 0.0
    %206 = vmatprep.subr.mxu0 0.0
    %207 = vmatpush2.xpose.msra.mxu0 0.0
    %208 = vmatprep.subr.mxu0 0.0
    %209 = vmatpush2.xpose.msra.mxu0 0.0
    %210 = vmatprep.subr.mxu0 0.0
    %211 = vmatpush2.xpose.msra.mxu0 0.0
    %212 = vmatprep.subr.mxu0 0.0
    %213 = vmatpush2.xpose.msra.mxu0 0.0
    %214 = vmatprep.subr.mxu0 0.0
    %215 = vmatpush2.xpose.msra.mxu0 0.0
    %216 = vmatprep.subr.mxu0 0.0
    %217 = vmatpush2.xpose.msra.mxu0 0.0
    %218 = vmatprep.subr.mxu0 0.0
    %219 = vmatpush2.xpose.msra.mxu0 0.0
    %220 = vmatprep.subr.mxu0 0.0
    %221 = vmatpush2.xpose.msra.mxu0 0.0
    %222 = vmatprep.subr.mxu0 0.0
    %223 = vmatpush2.xpose.msra.mxu0 0.0
    %224 = vmatprep.subr.mxu0 0.0
    %225 = vmatpush2.xpose.msra.mxu0 0.0
    %226 = vmatprep.subr.mxu0 0.0
    %227 = vmatpush2.xpose.msra.mxu0 0.0
    %228 = vmatprep.subr.mxu0 0.0
    %229 = vmatpush2.xpose.msra.mxu0 0.0
    %230 = vmatprep.subr.mxu0 0.0
    %231 = vmatpush2.xpose.msra.mxu0 0.0
    %232 = vmatprep.mubr.f32.mxu0 0.0
    %233 = vmatmul.mubr.f32.gmra.mxu0 %v163
    %v234 = vpop.f32.mrf.mxu0
    %v235 = vadd.f32 0.0, %v234
    %v236 = vpop.f32.mrf.mxu0
    %237 = vdwg.mxu0
    %v238 = vmul.f32 %v235, %v160
    %v240 = vsel %vm161, %v19, 0
    %v243 = vsel %vm161, %v20, 0
    %245 = vmatprep.subr.mxu0 0.0
    %246 = vmatpush1.xpose.msra.mxu0 0.0
    %247 = vmatprep.subr.mxu0 0.0
    %248 = vmatpush1.xpose.msra.mxu0 0.0
    %249 = vmatprep.subr.mxu0 0.0
    %250 = vmatpush1.xpose.msra.mxu0 0.0
    %251 = vmatprep.subr.mxu0 0.0
    %252 = vmatpush1.xpose.msra.mxu0 0.0
    %253 = vmatprep.subr.mxu0 0.0
    %254 = vmatpush1.xpose.msra.mxu0 0.0
    %255 = vmatprep.subr.mxu0 0.0
    %256 = vmatpush1.xpose.msra.mxu0 0.0
    %257 = vmatprep.subr.mxu0 0.0
    %258 = vmatpush1.xpose.msra.mxu0 0.0
    %259 = vmatprep.subr.mxu0 0.0
    %260 = vmatpush1.xpose.msra.mxu0 0.0
    %261 = vmatprep.subr.mxu0 0.0
    %262 = vmatpush1.xpose.msra.mxu0 0.0
    %263 = vmatprep.subr.mxu0 0.0
    %264 = vmatpush1.xpose.msra.mxu0 0.0
    %265 = vmatprep.subr.mxu0 0.0
    %266 = vmatpush1.xpose.msra.mxu0 0.0
    %267 = vmatprep.subr.mxu0 0.0
    %268 = vmatpush1.xpose.msra.mxu0 0.0
    %269 = vmatprep.subr.mxu0 0.0
    %270 = vmatpush1.xpose.msra.mxu0 0.0
    %271 = vmatprep.subr.mxu0 0.0
    %272 = vmatpush1.xpose.msra.mxu0 0.0
    %273 = vmatprep.subr.mxu0 0.0
    %274 = vmatpush1.xpose.msra.mxu0 0.0
    %275 = vmatprep.subr.mxu0 0.0
    %276 = vmatpush1.xpose.msra.mxu0 %v166
    %277 = vmatprep.subr.mxu0 0.0
    %278 = vmatpush2.xpose.msra.mxu0 0.0
    %279 = vmatprep.subr.mxu0 0.0
    %280 = vmatpush2.xpose.msra.mxu0 0.0
    %281 = vmatprep.subr.mxu0 0.0
    %282 = vmatpush2.xpose.msra.mxu0 0.0
    %283 = vmatprep.subr.mxu0 0.0
    %284 = vmatpush2.xpose.msra.mxu0 0.0
    %285 = vmatprep.subr.mxu0 0.0
    %286 = vmatpush2.xpose.msra.mxu0 0.0
    %287 = vmatprep.subr.mxu0 0.0
    %288 = vmatpush2.xpose.msra.mxu0 0.0
    %289 = vmatprep.subr.mxu0 0.0
    %290 = vmatpush2.xpose.msra.mxu0 0.0
    %291 = vmatprep.subr.mxu0 0.0
    %292 = vmatpush2.xpose.msra.mxu0 0.0
    %293 = vmatprep.subr.mxu0 0.0
    %294 = vmatpush2.xpose.msra.mxu0 0.0
    %295 = vmatprep.subr.mxu0 0.0
    %296 = vmatpush2.xpose.msra.mxu0 0.0
    %297 = vmatprep.subr.mxu0 0.0
    %298 = vmatpush2.xpose.msra.mxu0 0.0
    %299 = vmatprep.subr.mxu0 0.0
    %300 = vmatpush2.xpose.msra.mxu0 0.0
    %301 = vmatprep.subr.mxu0 0.0
    %302 = vmatpush2.xpose.msra.mxu0 0.0
    %303 = vmatprep.subr.mxu0 0.0
    %304 = vmatpush2.xpose.msra.mxu0 0.0
    %305 = vmatprep.subr.mxu0 0.0
    %306 = vmatpush2.xpose.msra.mxu0 0.0
    %307 = vmatprep.subr.mxu0 0.0
    %308 = vmatpush2.xpose.msra.mxu0 0.0
    %309 = vmatprep.mubr.f32.mxu0 0.0
    %310 = vmatmul.mubr.f32.gmra.mxu0 %v240
    %v311 = vpop.f32.mrf.mxu0
    %v312 = vadd.f32 0.0, %v311
    %v313 = vpop.f32.mrf.mxu0
    %314 = vmatprep.mubr.f32.mxu0 0.0
    %315 = vmatmul.mubr.f32.gmra.mxu0 %v243
    %v316 = vpop.f32.mrf.mxu0
    %v317 = vadd.f32 0.0, %v316
    %v318 = vpop.f32.mrf.mxu0
    %319 = vdwg.mxu0
    %v320 = vmul.f32 %v312, %v160
    %v321 = vmul.f32 %v317, %v160
    %v322 = vsel %vm150, %v238, -inf
    %323 = vmax.xlane.f32.xlu0 %v322
    %v324 = vpop.xlane.xlu0 %323
    %v325 = vsub.f32 %v238, %v324
    %v326 = vmul.f32 %v325, 1.442695
    %v327 = vpow.pop %v326
    %v328 = vsel %vm150, %v327, 0.0
    %329 = vadd.xlane.f32.xlu0 %v328
    %v330 = vpop.xlane.xlu0 %329
    %v331 = vlog2.pop %v330
    %v332 = vmul.f32 %v331, 0.6931472
    %v333 = vadd.f32 %v324, %v332
    %v334 = vmul.f32 %v238, %v31
    %v335 = vsel %vm150, %v334, 0.0
    %336 = vadd.xlane.f32.xlu0 %v335
    %v337 = vpop.xlane.xlu0 %336
    %v338 = vsub.f32 %v333, %v337
    %vm339 = vcmask 7168
    %v340 = vsel %vm339, %v338, 0.0
    %341 = vadd.xlane.f32.xlu0 %v340
    %v342 = vpop.xlane.xlu0 %341
    %v343 = vrot.slane %v342, 4
    %v344 = vadd.f32 %v342, %v343
    %v345 = vrot.slane %v344, 2
    %v346 = vadd.f32 %v344, %v345
    %v347 = vrot.slane %v346, 1
    %v348 = vadd.f32 %v346, %v347
    %s349 = vtos %v348
    %v350 = vsel %vm150, %v320, -inf
    %351 = vmax.xlane.f32.xlu0 %v350
    %v352 = vpop.xlane.xlu0 %351
    %v353 = vsel %vm150, %v321, -inf
    %354 = vmax.xlane.f32.xlu0 %v353
    %v355 = vpop.xlane.xlu0 %354
    %v356 = vsub.f32 %v320, %v352
    %v357 = vsub.f32 %v321, %v355
    %v358 = vmul.f32 %v356, 1.442695
    %v359 = vpow.pop %v358
    %v360 = vmul.f32 %v357, 1.442695
    %v361 = vpow.pop %v360
    %v362 = vsel %vm150, %v359, 0.0
    %363 = vadd.xlane.f32.xlu0 %v362
    %v364 = vpop.xlane.xlu0 %363
    %v365 = vsel %vm150, %v361, 0.0
    %366 = vadd.xlane.f32.xlu0 %v365
    %v367 = vpop.xlane.xlu0 %366
    %v368 = vlog2.pop %v364
    %v369 = vmul.f32 %v368, 0.6931472
    %v370 = vlog2.pop %v367
    %v371 = vmul.f32 %v370, 0.6931472
    %v372 = vadd.f32 %v352, %v369
    %v373 = vadd.f32 %v355, %v371
    %v374 = vmul.f32 %v320, %v42
    %v375 = vmul.f32 %v321, %v43
    %v376 = vsel %vm150, %v374, 0.0
    %377 = vadd.xlane.f32.xlu0 %v376
    %v378 = vpop.xlane.xlu0 %377
    %v379 = vsel %vm150, %v375, 0.0
    %380 = vadd.xlane.f32.xlu0 %v379
    %v381 = vpop.xlane.xlu0 %380
    %v382 = vsub.f32 %v372, %v378
    %v383 = vsub.f32 %v373, %v381
    %v384 = vsel %vm339, %v382, 0.0
    %v385 = vsel %vm339, %v383, 0.0
    %v386 = vadd.f32 %v384, %v385
    %387 = vadd.xlane.f32.xlu0 %v386
    %v388 = vpop.xlane.xlu0 %387
    %v389 = vrot.slane %v388, 4
    %v390 = vadd.f32 %v388, %v389
    %v391 = vrot.slane %v390, 2
    %v392 = vadd.f32 %v390, %v391
    %v393 = vrot.slane %v392, 1
    %v394 = vadd.f32 %v392, %v393
    %s395 = vtos %v394
    %s396 = sadd.f32 %s349, %s395
    %s397 = smul.f32 %s396, 0.041666668
    %s398 = scalar_lea.smem [#allocation2], 0
    %399 = sst [smem:[%s398]] %s397
    // Predicated region
    $region18: #{tpu_custom_call.1} parent=1 // pred_check
      _
    $region19: #{tpu_custom_call.1} parent=1 // pred_check_branch
      %401 = sbr.rel (0) target = $region21
    $region20: #{tpu_custom_call.1} parent=1 // pred_region
      %s403 = ssub.s32 16, 16
      %404 = vsyncadd [#allocation3], %s403
      %407 = dma.smem_to_hbm [#allocation2], 16, %s4, [#allocation3]
    $region21: #{tpu_custom_call.1} parent=1 // pred_fallthru
      _
    // Predicated region
    $region22: #{tpu_custom_call.1} parent=1 // pred_check
      _
    $region23: #{tpu_custom_call.1} parent=1 // pred_check_branch
      %409 = sbr.rel (0) target = $region25
    $region24: #{tpu_custom_call.1} parent=1 // pred_region
      %410 = dma.done [#allocation3], 16
    $region25: #{tpu_custom_call.1} parent=1 // pred_fallthru
      _
    %411 = sfence
    %412 = vsyncpa [#allocation3], 1

</llo_original>
